<compile_context>
chip_gen: v6e
topology: v6e:2x2x1
jax: 0.10.0
libtpu: 0.0.40
codegen_flags: <defaults>
</compile_context>

<pallas_src>
import jax
import jax.numpy as jnp
from jax.experimental import pallas as pl
from jax.experimental.pallas import tpu as pltpu


def _round_up(x, m):
    return (x + m - 1) // m * m


def _choose_tiles(B, C, HW, x_itemsize, budget_bytes=28 * 1024 * 1024):
    """Pick (TB, THW) so double-buffered x tiles + f32 accumulators fit VMEM."""
    # Largest divisor of B that is <= 8 (keeps grid axis 0 clean, no batch masking).
    tb = next(t for t in range(min(B, 8), 0, -1) if B % t == 0)
    # Lane (HW) chunk: full extent when small (always a legal block), else a
    # multiple of 128 big enough to hit the HBM roofline.
    thw = HW if HW <= 512 else 512

    def est(tb_, thw_):
        blk = tb_ * C * thw_
        return 2 * blk * x_itemsize + 2 * blk * 4  # 2x dbl-buffered input + 2 f32 accs

    while est(tb, thw) > budget_bytes:
        if tb > 1:
            tb = next(t for t in range(tb - 1, 0, -1) if B % t == 0)
        elif thw > 128 and thw % 128 == 0:
            thw = max(128, _round_up(thw // 2, 128))
        else:
            break
    return tb, thw


def _make_kernel(HW, thw, needs_mask):
    inv_hw = 1.0 / float(HW)

    def kernel(x_ref, w1_ref, w2_ref, o_ref, sum_acc, max_acc):
        # x_ref:  (TB, C, THW)  native dtype (f32 or bf16)
        # w1_ref: (C, Cr) f32    w2_ref: (Cr, C) f32
        # o_ref:  (TB, C)        sum_acc/max_acc: (TB, C, THW) f32 scratch
        k = pl.program_id(1)

        @pl.when(k == 0)
        def _init():
            sum_acc[...] = jnp.zeros_like(sum_acc)
            max_acc[...] = jnp.full_like(max_acc, -jnp.inf)

        xc = x_ref[...].astype(jnp.float32)

        if needs_mask:
            # Last HW chunk extends past the real extent; garbage lanes are masked.
            idx = jax.lax.broadcasted_iota(jnp.int32, xc.shape, 2) + k * thw
            valid = idx < HW
            sum_acc[...] += jnp.where(valid, xc, 0.0)
            max_acc[...] = jnp.maximum(max_acc[...], jnp.where(valid, xc, -jnp.inf))
        else:
            sum_acc[...] += xc
            max_acc[...] = jnp.maximum(max_acc[...], xc)

        @pl.when(k == pl.num_programs(1) - 1)
        def _finalize():
            # One cross-lane collapse per output row, only at the last step.
            avg = jnp.sum(sum_acc[...], axis=-1) * inv_hw      # (TB, C)
            mx = jnp.max(max_acc[...], axis=-1)                # (TB, C)

            w1 = w1_ref[...]
            w2 = w2_ref[...]
            # fc2 is linear: fc2(relu(fc1(avg))) + fc2(relu(fc1(mx)))
            #              = fc2( relu(fc1(avg)) + relu(fc1(mx)) )
            h = (jnp.maximum(jnp.dot(avg, w1, preferred_element_type=jnp.float32), 0.0)
                 + jnp.maximum(jnp.dot(mx, w1, preferred_element_type=jnp.float32), 0.0))
            s = jnp.dot(h, w2, preferred_element_type=jnp.float32)   # (TB, C)
            o_ref[...] = jax.nn.sigmoid(s).astype(o_ref.dtype)

    return kernel


def chaeenls_attention(x, w1, w2):
    """x: (B, C, H, W) NCHW (f32 or bf16); w1: (C, C//r) f32; w2: (C//r, C) f32."""
    B, C, H, W = x.shape
    Cr = w1.shape[1]
    HW = H * W

    if x.dtype not in (jnp.float32, jnp.bfloat16):
        x = x.astype(jnp.float32)
    x_flat = x.reshape(B, C, HW)          # keep native dtype on the HBM->VMEM path
    w1 = w1.astype(jnp.float32)
    w2 = w2.astype(jnp.float32)

    tb, thw = _choose_tiles(B, C, HW, x_flat.dtype.itemsize)
    nk = pl.cdiv(HW, thw)
    needs_mask = (nk * thw) != HW

    blk = tb * C * thw
    est_bytes = (2 * blk * x_flat.dtype.itemsize      # double-buffered x tile
                 + 2 * blk * 4                         # two f32 accumulators
                 + 4 * (w1.size + w2.size) * 4         # resident weights (+ headroom)
                 + 2 * tb * C * 4)                     # output tile
    vmem_limit = int(min(max(2 * est_bytes, 32 * 1024 * 1024), 56 * 1024 * 1024))

    kernel = _make_kernel(HW, thw, needs_mask)

    out = pl.pallas_call(
        kernel,
        out_shape=jax.ShapeDtypeStruct((B, C), x_flat.dtype),
        grid_spec=pltpu.PrefetchScalarGridSpec(
            num_scalar_prefetch=0,
            grid=(B // tb, nk),                        # (batch tiles, HW chunks)
            in_specs=[
                pl.BlockSpec((tb, C, thw), lambda b, k: (b, 0, k)),
                pl.BlockSpec((C, Cr), lambda b, k: (0, 0)),   # VMEM-resident weights
                pl.BlockSpec((Cr, C), lambda b, k: (0, 0)),
            ],
            out_specs=pl.BlockSpec((tb, C), lambda b, k: (b, 0)),
            scratch_shapes=[
                pltpu.VMEM((tb, C, thw), jnp.float32),   # running sum
                pltpu.VMEM((tb, C, thw), jnp.float32),   # running max
            ],
        ),
        compiler_params=pltpu.CompilerParams(
            dimension_semantics=("parallel", "arbitrary"),
            vmem_limit_bytes=vmem_limit,
        ),
    )(x_flat, w1, w2)

    return out.reshape(B, C, 1, 1)


def _reference(x, w1, w2):
    # Plain-JAX reference mirroring the PyTorch forward (f32 math).
    xf = x.astype(jnp.float32)
    avg = jnp.mean(xf, axis=(2, 3))                 # (B, C)
    mx = jnp.max(xf, axis=(2, 3))                   # (B, C)

    def mlp(v):
        return jnp.maximum(v @ w1, 0.0) @ w2

    return jax.nn.sigmoid(mlp(avg) + mlp(mx)).reshape(x.shape[0], x.shape[1], 1, 1)


if __name__ == "__main__":
    # Small, module-consistent shapes: in_channels=32, ratio=8 -> hidden=4.
    B, C, H, W = 2, 32, 16, 16
    ratio = 8
    Cr = C // ratio

    key = jax.random.PRNGKey(0)
    kx, k1, k2, kx2 = jax.random.split(key, 4)

    x = jax.random.normal(kx, (B, C, H, W), dtype=jnp.float32)

    # Deterministic init mimicking PyTorch conv default: bound = 1/sqrt(fan_in).
    b1 = 1.0 / jnp.sqrt(jnp.float32(C))
    b2 = 1.0 / jnp.sqrt(jnp.float32(Cr))
    w1_torch = jax.random.uniform(k1, (Cr, C), jnp.float32, -b1, b1)   # fc1 weight (out, in)
    w2_torch = jax.random.uniform(k2, (C, Cr), jnp.float32, -b2, b2)   # fc2 weight (out, in)

    # Right-multiply layout for the kernel.
    w1 = w1_torch.T   # (C, Cr)
    w2 = w2_torch.T   # (Cr, C)

    # Primary check: f32, HW a multiple of 128 (single-chunk fast path).
    out = jax.block_until_ready(chaeenls_attention(x, w1, w2))
    ref = _reference(x, w1, w2)
    assert out.shape == (B, C, 1, 1)
    assert jnp.allclose(out, ref, atol=1e-5, rtol=1e-5), "mismatch vs reference (f32)"

    # Secondary check: bf16 input with non-128-divisible spatial extent ->
    # exercises multi-chunk accumulation + masked trailing chunk + bf16 streaming.
    H2 = W2 = 33
    x2 = jax.random.normal(kx2, (B, C, H2, W2), jnp.float32).astype(jnp.bfloat16)
    out2 = jax.block_until_ready(chaeenls_attention(x2, w1, w2))
    ref2 = _reference(x2, w1, w2)
    assert out2.shape == (B, C, 1, 1)
    assert jnp.allclose(out2.astype(jnp.float32), ref2, atol=1e-2, rtol=1e-2), \
        "mismatch vs reference (bf16, masked chunks)"

    print("KERNEL_OK")
</pallas_src>

<mosaic_0001>
module attributes {stable_mosaic.version = 11 : i64} {
  func.func @kernel(%arg0: i32, %arg1: i32, %arg2: memref<2x32x256xf32, #tpu.memory_space<vmem>>, %arg3: memref<32x4xf32, #tpu.memory_space<vmem>>, %arg4: memref<4x32xf32, #tpu.memory_space<vmem>>, %arg5: memref<2x32xf32, #tpu.memory_space<vmem>>, %arg6: memref<2x32x256xf32, #tpu.memory_space<vmem>>, %arg7: memref<2x32x256xf32, #tpu.memory_space<vmem>>) attributes {dimension_semantics = [#tpu.dimension_semantics<parallel>, #tpu.dimension_semantics<arbitrary>], iteration_bounds = array<i64: 1, 1>, scalar_prefetch = 0 : i64, scratch_operands = 2 : i64, tpu.core_type = #tpu.core_type<tc>, window_params = [{transform_indices = @transform_0, window_bounds = array<i64: 2, 32, 256>}, {pipeline_mode = #tpu.pipeline_mode<synchronous>, transform_indices = @transform_1, window_bounds = array<i64: 32, 4>}, {pipeline_mode = #tpu.pipeline_mode<synchronous>, transform_indices = @transform_2, window_bounds = array<i64: 4, 32>}, {transform_indices = @transform_3, window_bounds = array<i64: 2, 32>}]} {
    %c0_i32 = arith.constant 0 : i32
    %0 = arith.cmpi eq, %arg1, %c0_i32 : i32
    %1 = arith.extui %0 : i1 to i32
    %c0_i32_0 = arith.constant 0 : i32
    %2 = arith.cmpi ne, %1, %c0_i32_0 : i32
    scf.if %2 {
      %cst = arith.constant 0.000000e+00 : f32
      %13 = vector.broadcast %cst : f32 to vector<2x32x256xf32>
      %c0_17 = arith.constant 0 : index
      %c0_18 = arith.constant 0 : index
      %c0_19 = arith.constant 0 : index
      %14 = vector.load %arg6[%c0_17, %c0_18, %c0_19] : memref<2x32x256xf32, #tpu.memory_space<vmem>>, vector<2x32x256xf32>
      tpu.vector_store %arg6[%c0_17, %c0_18, %c0_19], %13 {strides = array<i32>} : memref<2x32x256xf32, #tpu.memory_space<vmem>>, vector<2x32x256xf32>,
      %cst_20 = arith.constant 0xFF800000 : f32
      %15 = vector.broadcast %cst_20 : f32 to vector<2x32x256xf32>
      %c0_21 = arith.constant 0 : index
      %c0_22 = arith.constant 0 : index
      %c0_23 = arith.constant 0 : index
      %16 = vector.load %arg7[%c0_21, %c0_22, %c0_23] : memref<2x32x256xf32, #tpu.memory_space<vmem>>, vector<2x32x256xf32>
      tpu.vector_store %arg7[%c0_21, %c0_22, %c0_23], %15 {strides = array<i32>} : memref<2x32x256xf32, #tpu.memory_space<vmem>>, vector<2x32x256xf32>,
    } else {
    }
    %c0 = arith.constant 0 : index
    %c0_1 = arith.constant 0 : index
    %c0_2 = arith.constant 0 : index
    %3 = vector.load %arg2[%c0, %c0_1, %c0_2] : memref<2x32x256xf32, #tpu.memory_space<vmem>>, vector<2x32x256xf32>
    %c0_3 = arith.constant 0 : index
    %c0_4 = arith.constant 0 : index
    %c0_5 = arith.constant 0 : index
    %4 = vector.load %arg6[%c0_3, %c0_4, %c0_5] : memref<2x32x256xf32, #tpu.memory_space<vmem>>, vector<2x32x256xf32>
    %5 = arith.addf %4, %3 : vector<2x32x256xf32>
    %c0_6 = arith.constant 0 : index
    %c0_7 = arith.constant 0 : index
    %c0_8 = arith.constant 0 : index
    %6 = vector.load %arg6[%c0_6, %c0_7, %c0_8] : memref<2x32x256xf32, #tpu.memory_space<vmem>>, vector<2x32x256xf32>
    tpu.vector_store %arg6[%c0_6, %c0_7, %c0_8], %5 {strides = array<i32>} : memref<2x32x256xf32, #tpu.memory_space<vmem>>, vector<2x32x256xf32>,
    %c0_9 = arith.constant 0 : index
    %c0_10 = arith.constant 0 : index
    %c0_11 = arith.constant 0 : index
    %7 = vector.load %arg7[%c0_9, %c0_10, %c0_11] : memref<2x32x256xf32, #tpu.memory_space<vmem>>, vector<2x32x256xf32>
    %8 = arith.maximumf %7, %3 : vector<2x32x256xf32>
    %c0_12 = arith.constant 0 : index
    %c0_13 = arith.constant 0 : index
    %c0_14 = arith.constant 0 : index
    %9 = vector.load %arg7[%c0_12, %c0_13, %c0_14] : memref<2x32x256xf32, #tpu.memory_space<vmem>>, vector<2x32x256xf32>
    tpu.vector_store %arg7[%c0_12, %c0_13, %c0_14], %8 {strides = array<i32>} : memref<2x32x256xf32, #tpu.memory_space<vmem>>, vector<2x32x256xf32>,
    %c0_i32_15 = arith.constant 0 : i32
    %10 = arith.cmpi eq, %arg1, %c0_i32_15 : i32
    %11 = arith.extui %10 : i1 to i32
    %c0_i32_16 = arith.constant 0 : i32
    %12 = arith.cmpi ne, %11, %c0_i32_16 : i32
    scf.if %12 {
      %c0_17 = arith.constant 0 : index
      %c0_18 = arith.constant 0 : index
      %c0_19 = arith.constant 0 : index
      %13 = vector.load %arg6[%c0_17, %c0_18, %c0_19] : memref<2x32x256xf32, #tpu.memory_space<vmem>>, vector<2x32x256xf32>
      %cst = arith.constant dense<0.000000e+00> : vector<2x32xf32>
      %14 = vector.multi_reduction <add>, %13, %cst [2] : vector<2x32x256xf32> to vector<2x32xf32>
      %cst_20 = arith.constant 3.906250e-03 : f32
      %15 = vector.broadcast %cst_20 : f32 to vector<2x32xf32>
      %16 = arith.mulf %14, %15 : vector<2x32xf32>
      %c0_21 = arith.constant 0 : index
      %c0_22 = arith.constant 0 : index
      %c0_23 = arith.constant 0 : index
      %17 = vector.load %arg7[%c0_21, %c0_22, %c0_23] : memref<2x32x256xf32, #tpu.memory_space<vmem>>, vector<2x32x256xf32>
      %cst_24 = arith.constant dense<0xFF800000> : vector<2x32xf32>
      %18 = vector.multi_reduction <maximumf>, %17, %cst_24 [2] : vector<2x32x256xf32> to vector<2x32xf32>
      %c0_25 = arith.constant 0 : index
      %c0_26 = arith.constant 0 : index
      %19 = vector.load %arg3[%c0_25, %c0_26] : memref<32x4xf32, #tpu.memory_space<vmem>>, vector<32x4xf32>
      %c0_27 = arith.constant 0 : index
      %c0_28 = arith.constant 0 : index
      %20 = vector.load %arg4[%c0_27, %c0_28] : memref<4x32xf32, #tpu.memory_space<vmem>>, vector<4x32xf32>
      %cst_29 = arith.constant dense<0.000000e+00> : vector<2x4xf32>
      %21 = tpu.matmul %16, %19, %cst_29 {dimension_numbers = #tpu.dot_dimension_numbers<[1], [0], [0], [1], [0, 0, 1, 1], [], []>} : vector<2x32xf32>, vector<32x4xf32>, vector<2x4xf32> -> vector<2x4xf32>
      %cst_30 = arith.constant 0.000000e+00 : f32
      %22 = vector.broadcast %cst_30 : f32 to vector<2x4xf32>
      %23 = arith.maximumf %21, %22 : vector<2x4xf32>
      %cst_31 = arith.constant dense<0.000000e+00> : vector<2x4xf32>
      %24 = tpu.matmul %18, %19, %cst_31 {dimension_numbers = #tpu.dot_dimension_numbers<[1], [0], [0], [1], [0, 0, 1, 1], [], []>} : vector<2x32xf32>, vector<32x4xf32>, vector<2x4xf32> -> vector<2x4xf32>
      %cst_32 = arith.constant 0.000000e+00 : f32
      %25 = vector.broadcast %cst_32 : f32 to vector<2x4xf32>
      %26 = arith.maximumf %24, %25 : vector<2x4xf32>
      %27 = arith.addf %23, %26 : vector<2x4xf32>
      %cst_33 = arith.constant dense<0.000000e+00> : vector<2x32xf32>
      %28 = tpu.matmul %27, %20, %cst_33 {dimension_numbers = #tpu.dot_dimension_numbers<[1], [0], [0], [1], [0, 0, 1, 1], [], []>} : vector<2x4xf32>, vector<4x32xf32>, vector<2x32xf32> -> vector<2x32xf32>
      %29 = arith.negf %28 : vector<2x32xf32>
      %30 = math.exp %29 : vector<2x32xf32>
      %cst_34 = arith.constant 1.000000e+00 : f32
      %31 = vector.broadcast %cst_34 : f32 to vector<2x32xf32>
      %32 = arith.addf %31, %30 : vector<2x32xf32>
      %33 = arith.divf %31, %32 : vector<2x32xf32>
      %c0_35 = arith.constant 0 : index
      %c0_36 = arith.constant 0 : index
      %34 = vector.load %arg5[%c0_35, %c0_36] : memref<2x32xf32, #tpu.memory_space<vmem>>, vector<2x32xf32>
      tpu.vector_store %arg5[%c0_35, %c0_36], %33 {strides = array<i32>} : memref<2x32xf32, #tpu.memory_space<vmem>>, vector<2x32xf32>,
    } else {
    }
    return
  }
  func.func @transform_0(%arg0: i32, %arg1: i32) -> (i32, i32, i32) {
    %c0_i32 = arith.constant 0 : i32
    %c0_i32_0 = arith.constant 0 : i32
    return %arg0, %c0_i32, %arg1 : i32, i32, i32
  }
  func.func @transform_1(%arg0: i32, %arg1: i32) -> (i32, i32) {
    %c0_i32 = arith.constant 0 : i32
    %c0_i32_0 = arith.constant 0 : i32
    %c0_i32_1 = arith.constant 0 : i32
    return %c0_i32, %c0_i32_0 : i32, i32
  }
  func.func @transform_2(%arg0: i32, %arg1: i32) -> (i32, i32) {
    %c0_i32 = arith.constant 0 : i32
    %c0_i32_0 = arith.constant 0 : i32
    %c0_i32_1 = arith.constant 0 : i32
    return %c0_i32, %c0_i32_0 : i32, i32
  }
  func.func @transform_3(%arg0: i32, %arg1: i32) -> (i32, i32) {
    %c0_i32 = arith.constant 0 : i32
    %c0_i32_0 = arith.constant 0 : i32
    return %arg0, %c0_i32 : i32, i32
  }
}

</mosaic_0001>

<llo_original>
// kernel: tpu_custom_call.1
$region0: #{tpu_custom_call.1}
  #allocation0 [shape = 'u32[]', space=smem, size = 0x4, offset = 0x4, fixed_abs, tag = 'smem constant byte address 0x4 - core index']
  #allocation1 [shape = 'u32[144,128]{1,0:T(1,128)}', space=vmem, size = 0x12000, scoped, tag = 'internal scratch']
  #allocation2 [shape = 'f32[2,32,256]{2,1,0:T(8,128)}', space=vmem, size = 0x10000, scoped, tag = 'scratch operand']
  #allocation3 [shape = 'f32[2,32,256]{2,1,0:T(8,128)}', space=vmem, size = 0x10000, scoped, tag = 'scratch operand']
  %s0 = inlined_call_operand.hbm [shape: f32[2,32,256], index: 0, kind: input, shape index: {}]
  %s1 = inlined_call_operand.vmem [shape: f32[32,4], index: 1, kind: input, shape index: {}]
  %s2 = inlined_call_operand.vmem [shape: f32[4,32], index: 2, kind: input, shape index: {}]
  %s3 = inlined_call_operand.hbm [shape: f32[2,32], index: 3, kind: output, shape index: {}]
  %s4 = sld [smem:[#allocation0]]
  $region34: #{tpu_custom_call.1} parent=0
    _
  %s6 = ssub.s32 1, %s4
  %s7 = scalar_select 0, %s6, %s4
  $region1: #{tpu_custom_call.1} parent=0
    #allocation4 [shape = 'u8[65536]{0}', space=vmem, size = 0x10000, scoped, tag = 'input window, operand 0, single buffered']
    #allocation5 [shape = 's32[1]{0}', space=sflag, size = 0x4, scoped, tag = 'scoped memory for tpu_custom_call.1']
    #allocation6 [shape = 's32[1]{0}', space=sflag, size = 0x4, scoped, tag = 'scoped memory for tpu_custom_call.1']
    #allocation7 [shape = 'u8[1024]{0}', space=vmem, size = 0x400, scoped, tag = 'output window, operand 0, single buffered']
    %8 = vsyncpa [#allocation5], 0
    %9 = vsyncpa [#allocation6], 0
    // Predicated region
    $region2: #{tpu_custom_call.1} parent=1 // pred_check
      _
    $region3: #{tpu_custom_call.1} parent=1 // pred_check_branch
      %11 = sbr.rel (0) target = $region5
    $region4: #{tpu_custom_call.1} parent=1 // pred_region
      %s13 = ssub.s32 2048, 2048
      %14 = vsyncadd [#allocation5], %s13
      %s15 = sshll.u32 [#allocation4], 4
      %s16 = int_to_ptr.vmem [resolvable:$true] %s15
      %21 = dma.hbm_to_vmem [thread:$0]  %s0, 2048, %s16, [#allocation5], 256, 256, 16
    $region5: #{tpu_custom_call.1} parent=1 // pred_fallthru
      _
    // Predicated region
    $region6: #{tpu_custom_call.1} parent=1 // pred_check
      _
    $region7: #{tpu_custom_call.1} parent=1 // pred_check_branch
      %23 = sbr.rel (0) target = $region9
    $region8: #{tpu_custom_call.1} parent=1 // pred_region
      _
    $region9: #{tpu_custom_call.1} parent=1 // pred_fallthru
      _
    // Predicated region
    $region10: #{tpu_custom_call.1} parent=1 // pred_check
      _
    $region11: #{tpu_custom_call.1} parent=1 // pred_check_branch
      %25 = sbr.rel (0) target = $region13
    $region12: #{tpu_custom_call.1} parent=1 // pred_region
      _
    $region13: #{tpu_custom_call.1} parent=1 // pred_fallthru
      _
    // Predicated region
    $region14: #{tpu_custom_call.1} parent=1 // pred_check
      _
    $region15: #{tpu_custom_call.1} parent=1 // pred_check_branch
      %27 = sbr.rel (0) target = $region17
    $region16: #{tpu_custom_call.1} parent=1 // pred_region
      %28 = dma.done [#allocation5], 2048
    $region17: #{tpu_custom_call.1} parent=1 // pred_fallthru
      _
    %p29 = scmp.eq.s32.totalorder 0, 0
    // Predicated region
    $region18: #{tpu_custom_call.1} parent=1 // pred_check
      %p30 = pneg %p29
    $region19: #{tpu_custom_call.1} parent=1 // pred_check_branch
      %32 = sbr.rel (%p30) target = $region21
    $region20: #{tpu_custom_call.1} parent=1 // pred_region
      %33 = vst [vmem:[#allocation2] sm:$0xff] 0.0
      %34 = vst [vmem:[#allocation2 + $0x8] sm:$0xff] 0.0
      %35 = vst [vmem:[#allocation2 + $0x10] sm:$0xff] 0.0
      %36 = vst [vmem:[#allocation2 + $0x18] sm:$0xff] 0.0
      %37 = vst [vmem:[#allocation2 + $0x20] sm:$0xff] 0.0
      %38 = vst [vmem:[#allocation2 + $0x28] sm:$0xff] 0.0
      %39 = vst [vmem:[#allocation2 + $0x30] sm:$0xff] 0.0
      %40 = vst [vmem:[#allocation2 + $0x38] sm:$0xff] 0.0
      %41 = vst [vmem:[#allocation2 + $0x40] sm:$0xff] 0.0
      %42 = vst [vmem:[#allocation2 + $0x48] sm:$0xff] 0.0
      %43 = vst [vmem:[#allocation2 + $0x50] sm:$0xff] 0.0
      %44 = vst [vmem:[#allocation2 + $0x58] sm:$0xff] 0.0
      %45 = vst [vmem:[#allocation2 + $0x60] sm:$0xff] 0.0
      %46 = vst [vmem:[#allocation2 + $0x68] sm:$0xff] 0.0
      %47 = vst [vmem:[#allocation2 + $0x70] sm:$0xff] 0.0
      %48 = vst [vmem:[#allocation2 + $0x78] sm:$0xff] 0.0
      %49 = vst [vmem:[#allocation3] sm:$0xff] -inf
      %50 = vst [vmem:[#allocation3 + $0x8] sm:$0xff] -inf
      %51 = vst [vmem:[#allocation3 + $0x10] sm:$0xff] -inf
      %52 = vst [vmem:[#allocation3 + $0x18] sm:$0xff] -inf
      %53 = vst [vmem:[#allocation3 + $0x20] sm:$0xff] -inf
      %54 = vst [vmem:[#allocation3 + $0x28] sm:$0xff] -inf
      %55 = vst [vmem:[#allocation3 + $0x30] sm:$0xff] -inf
      %56 = vst [vmem:[#allocation3 + $0x38] sm:$0xff] -inf
      %57 = vst [vmem:[#allocation3 + $0x40] sm:$0xff] -inf
      %58 = vst [vmem:[#allocation3 + $0x48] sm:$0xff] -inf
      %59 = vst [vmem:[#allocation3 + $0x50] sm:$0xff] -inf
      %60 = vst [vmem:[#allocation3 + $0x58] sm:$0xff] -inf
      %61 = vst [vmem:[#allocation3 + $0x60] sm:$0xff] -inf
      %62 = vst [vmem:[#allocation3 + $0x68] sm:$0xff] -inf
      %63 = vst [vmem:[#allocation3 + $0x70] sm:$0xff] -inf
      %64 = vst [vmem:[#allocation3 + $0x78] sm:$0xff] -inf
    $region21: #{tpu_custom_call.1} parent=1 // pred_fallthru
      _
    %v65 = vld [vmem:[#allocation4] sm:$0xff]
    %v66 = vld [vmem:[#allocation4 + $0x8] sm:$0xff]
    %v67 = vld [vmem:[#allocation4 + $0x10] sm:$0xff]
    %v68 = vld [vmem:[#allocation4 + $0x18] sm:$0xff]
    %v69 = vld [vmem:[#allocation4 + $0x20] sm:$0xff]
    %v70 = vld [vmem:[#allocation4 + $0x28] sm:$0xff]
    %v71 = vld [vmem:[#allocation4 + $0x30] sm:$0xff]
    %v72 = vld [vmem:[#allocation4 + $0x38] sm:$0xff]
    %v73 = vld [vmem:[#allocation4 + $0x40] sm:$0xff]
    %v74 = vld [vmem:[#allocation4 + $0x48] sm:$0xff]
    %v75 = vld [vmem:[#allocation4 + $0x50] sm:$0xff]
    %v76 = vld [vmem:[#allocation4 + $0x58] sm:$0xff]
    %v77 = vld [vmem:[#allocation4 + $0x60] sm:$0xff]
    %v78 = vld [vmem:[#allocation4 + $0x68] sm:$0xff]
    %v79 = vld [vmem:[#allocation4 + $0x70] sm:$0xff]
    %v80 = vld [vmem:[#allocation4 + $0x78] sm:$0xff]
    %v81 = vld [vmem:[#allocation2] sm:$0xff]
    %v82 = vld [vmem:[#allocation2 + $0x8] sm:$0xff]
    %v83 = vld [vmem:[#allocation2 + $0x10] sm:$0xff]
    %v84 = vld [vmem:[#allocation2 + $0x18] sm:$0xff]
    %v85 = vld [vmem:[#allocation2 + $0x20] sm:$0xff]
    %v86 = vld [vmem:[#allocation2 + $0x28] sm:$0xff]
    %v87 = vld [vmem:[#allocation2 + $0x30] sm:$0xff]
    %v88 = vld [vmem:[#allocation2 + $0x38] sm:$0xff]
    %v89 = vld [vmem:[#allocation2 + $0x40] sm:$0xff]
    %v90 = vld [vmem:[#allocation2 + $0x48] sm:$0xff]
    %v91 = vld [vmem:[#allocation2 + $0x50] sm:$0xff]
    %v92 = vld [vmem:[#allocation2 + $0x58] sm:$0xff]
    %v93 = vld [vmem:[#allocation2 + $0x60] sm:$0xff]
    %v94 = vld [vmem:[#allocation2 + $0x68] sm:$0xff]
    %v95 = vld [vmem:[#allocation2 + $0x70] sm:$0xff]
    %v96 = vld [vmem:[#allocation2 + $0x78] sm:$0xff]
    %v97 = vadd.f32 %v81, %v65
    %v98 = vadd.f32 %v82, %v66
    %v99 = vadd.f32 %v83, %v67
    %v100 = vadd.f32 %v84, %v68
    %v101 = vadd.f32 %v85, %v69
    %v102 = vadd.f32 %v86, %v70
    %v103 = vadd.f32 %v87, %v71
    %v104 = vadd.f32 %v88, %v72
    %v105 = vadd.f32 %v89, %v73
    %v106 = vadd.f32 %v90, %v74
    %v107 = vadd.f32 %v91, %v75
    %v108 = vadd.f32 %v92, %v76
    %v109 = vadd.f32 %v93, %v77
    %v110 = vadd.f32 %v94, %v78
    %v111 = vadd.f32 %v95, %v79
    %v112 = vadd.f32 %v96, %v80
    %113 = vst [vmem:[#allocation2] sm:$0xff] %v97
    %114 = vst [vmem:[#allocation2 + $0x8] sm:$0xff] %v98
    %115 = vst [vmem:[#allocation2 + $0x10] sm:$0xff] %v99
    %116 = vst [vmem:[#allocation2 + $0x18] sm:$0xff] %v100
    %117 = vst [vmem:[#allocation2 + $0x20] sm:$0xff] %v101
    %118 = vst [vmem:[#allocation2 + $0x28] sm:$0xff] %v102
    %119 = vst [vmem:[#allocation2 + $0x30] sm:$0xff] %v103
    %120 = vst [vmem:[#allocation2 + $0x38] sm:$0xff] %v104
    %121 = vst [vmem:[#allocation2 + $0x40] sm:$0xff] %v105
    %122 = vst [vmem:[#allocation2 + $0x48] sm:$0xff] %v106
    %123 = vst [vmem:[#allocation2 + $0x50] sm:$0xff] %v107
    %124 = vst [vmem:[#allocation2 + $0x58] sm:$0xff] %v108
    %125 = vst [vmem:[#allocation2 + $0x60] sm:$0xff] %v109
    %126 = vst [vmem:[#allocation2 + $0x68] sm:$0xff] %v110
    %127 = vst [vmem:[#allocation2 + $0x70] sm:$0xff] %v111
    %128 = vst [vmem:[#allocation2 + $0x78] sm:$0xff] %v112
    %v129 = vld [vmem:[#allocation3] sm:$0xff]
    %v130 = vld [vmem:[#allocation3 + $0x8] sm:$0xff]
    %v131 = vld [vmem:[#allocation3 + $0x10] sm:$0xff]
    %v132 = vld [vmem:[#allocation3 + $0x18] sm:$0xff]
    %v133 = vld [vmem:[#allocation3 + $0x20] sm:$0xff]
    %v134 = vld [vmem:[#allocation3 + $0x28] sm:$0xff]
    %v135 = vld [vmem:[#allocation3 + $0x30] sm:$0xff]
    %v136 = vld [vmem:[#allocation3 + $0x38] sm:$0xff]
    %v137 = vld [vmem:[#allocation3 + $0x40] sm:$0xff]
    %v138 = vld [vmem:[#allocation3 + $0x48] sm:$0xff]
    %v139 = vld [vmem:[#allocation3 + $0x50] sm:$0xff]
    %v140 = vld [vmem:[#allocation3 + $0x58] sm:$0xff]
    %v141 = vld [vmem:[#allocation3 + $0x60] sm:$0xff]
    %v142 = vld [vmem:[#allocation3 + $0x68] sm:$0xff]
    %v143 = vld [vmem:[#allocation3 + $0x70] sm:$0xff]
    %v144 = vld [vmem:[#allocation3 + $0x78] sm:$0xff]
    %v145 = vmax.f32 %v129, %v65
    %v146 = vmax.f32 %v130, %v66
    %v147 = vmax.f32 %v131, %v67
    %v148 = vmax.f32 %v132, %v68
    %v149 = vmax.f32 %v133, %v69
    %v150 = vmax.f32 %v134, %v70
    %v151 = vmax.f32 %v135, %v71
    %v152 = vmax.f32 %v136, %v72
    %v153 = vmax.f32 %v137, %v73
    %v154 = vmax.f32 %v138, %v74
    %v155 = vmax.f32 %v139, %v75
    %v156 = vmax.f32 %v140, %v76
    %v157 = vmax.f32 %v141, %v77
    %v158 = vmax.f32 %v142, %v78
    %v159 = vmax.f32 %v143, %v79
    %v160 = vmax.f32 %v144, %v80
    %161 = vst [vmem:[#allocation3] sm:$0xff] %v145
    %162 = vst [vmem:[#allocation3 + $0x8] sm:$0xff] %v146
    %163 = vst [vmem:[#allocation3 + $0x10] sm:$0xff] %v147
    %164 = vst [vmem:[#allocation3 + $0x18] sm:$0xff] %v148
    %165 = vst [vmem:[#allocation3 + $0x20] sm:$0xff] %v149
    %166 = vst [vmem:[#allocation3 + $0x28] sm:$0xff] %v150
    %167 = vst [vmem:[#allocation3 + $0x30] sm:$0xff] %v151
    %168 = vst [vmem:[#allocation3 + $0x38] sm:$0xff] %v152
    %169 = vst [vmem:[#allocation3 + $0x40] sm:$0xff] %v153
    %170 = vst [vmem:[#allocation3 + $0x48] sm:$0xff] %v154
    %171 = vst [vmem:[#allocation3 + $0x50] sm:$0xff] %v155
    %172 = vst [vmem:[#allocation3 + $0x58] sm:$0xff] %v156
    %173 = vst [vmem:[#allocation3 + $0x60] sm:$0xff] %v157
    %174 = vst [vmem:[#allocation3 + $0x68] sm:$0xff] %v158
    %175 = vst [vmem:[#allocation3 + $0x70] sm:$0xff] %v159
    %176 = vst [vmem:[#allocation3 + $0x78] sm:$0xff] %v160
    // Predicated region
    $region22: #{tpu_custom_call.1} parent=1 // pred_check
      %p177 = pneg %p29
    $region23: #{tpu_custom_call.1} parent=1 // pred_check_branch
      %179 = sbr.rel (%p177) target = $region25
    $region24: #{tpu_custom_call.1} parent=1 // pred_region
      %v180 = vld [vmem:[#allocation2] sm:$0xff]
      %v181 = vld [vmem:[#allocation2 + $0x8] sm:$0xff]
      %v182 = vld [vmem:[#allocation2 + $0x10] sm:$0xff]
      %v183 = vld [vmem:[#allocation2 + $0x18] sm:$0xff]
      %v184 = vld [vmem:[#allocation2 + $0x20] sm:$0xff]
      %v185 = vld [vmem:[#allocation2 + $0x28] sm:$0xff]
      %v186 = vld [vmem:[#allocation2 + $0x30] sm:$0xff]
      %v187 = vld [vmem:[#allocation2 + $0x38] sm:$0xff]
      %v188 = vld [vmem:[#allocation2 + $0x40] sm:$0xff]
      %v189 = vld [vmem:[#allocation2 + $0x48] sm:$0xff]
      %v190 = vld [vmem:[#allocation2 + $0x50] sm:$0xff]
      %v191 = vld [vmem:[#allocation2 + $0x58] sm:$0xff]
      %v192 = vld [vmem:[#allocation2 + $0x60] sm:$0xff]
      %v193 = vld [vmem:[#allocation2 + $0x68] sm:$0xff]
      %v194 = vld [vmem:[#allocation2 + $0x70] sm:$0xff]
      %v195 = vld [vmem:[#allocation2 + $0x78] sm:$0xff]
      %v196 = vadd.f32 %v180, %v181
      %197 = vadd.xlane.f32.xlu0 %v196
      %v198 = vpop.xlane.xlu0 %197
      %v199 = vadd.f32 %v182, %v183
      %200 = vadd.xlane.f32.xlu0 %v199
      %v201 = vpop.xlane.xlu0 %200
      %v202 = vadd.f32 %v184, %v185
      %203 = vadd.xlane.f32.xlu0 %v202
      %v204 = vpop.xlane.xlu0 %203
      %v205 = vadd.f32 %v186, %v187
      %206 = vadd.xlane.f32.xlu0 %v205
      %v207 = vpop.xlane.xlu0 %206
      %v208 = vadd.f32 %v188, %v189
      %209 = vadd.xlane.f32.xlu0 %v208
      %v210 = vpop.xlane.xlu0 %209
      %v211 = vadd.f32 %v190, %v191
      %212 = vadd.xlane.f32.xlu0 %v211
      %v213 = vpop.xlane.xlu0 %212
      %v214 = vadd.f32 %v192, %v193
      %215 = vadd.xlane.f32.xlu0 %v214
      %v216 = vpop.xlane.xlu0 %215
      %v217 = vadd.f32 %v194, %v195
      %218 = vadd.xlane.f32.xlu0 %v217
      %v219 = vpop.xlane.xlu0 %218
      %v220 = vmul.f32 %v198, 0.00390625
      %v221 = vmul.f32 %v201, 0.00390625
      %v222 = vmul.f32 %v204, 0.00390625
      %v223 = vmul.f32 %v207, 0.00390625
      %v224 = vmul.f32 %v210, 0.00390625
      %v225 = vmul.f32 %v213, 0.00390625
      %v226 = vmul.f32 %v216, 0.00390625
      %v227 = vmul.f32 %v219, 0.00390625
      %v228 = vld [vmem:[#allocation3] sm:$0xff]
      %v229 = vld [vmem:[#allocation3 + $0x8] sm:$0xff]
      %v230 = vld [vmem:[#allocation3 + $0x10] sm:$0xff]
      %v231 = vld [vmem:[#allocation3 + $0x18] sm:$0xff]
      %v232 = vld [vmem:[#allocation3 + $0x20] sm:$0xff]
      %v233 = vld [vmem:[#allocation3 + $0x28] sm:$0xff]
      %v234 = vld [vmem:[#allocation3 + $0x30] sm:$0xff]
      %v235 = vld [vmem:[#allocation3 + $0x38] sm:$0xff]
      %v236 = vld [vmem:[#allocation3 + $0x40] sm:$0xff]
      %v237 = vld [vmem:[#allocation3 + $0x48] sm:$0xff]
      %v238 = vld [vmem:[#allocation3 + $0x50] sm:$0xff]
      %v239 = vld [vmem:[#allocation3 + $0x58] sm:$0xff]
      %v240 = vld [vmem:[#allocation3 + $0x60] sm:$0xff]
      %v241 = vld [vmem:[#allocation3 + $0x68] sm:$0xff]
      %v242 = vld [vmem:[#allocation3 + $0x70] sm:$0xff]
      %v243 = vld [vmem:[#allocation3 + $0x78] sm:$0xff]
      %v244 = vmax.f32 %v228, %v229
      %245 = vmax.xlane.f32.xlu0 %v244
      %v246 = vpop.xlane.xlu0 %245
      %v247 = vmax.f32 %v230, %v231
      %248 = vmax.xlane.f32.xlu0 %v247
      %v249 = vpop.xlane.xlu0 %248
      %v250 = vmax.f32 %v232, %v233
      %251 = vmax.xlane.f32.xlu0 %v250
      %v252 = vpop.xlane.xlu0 %251
      %v253 = vmax.f32 %v234, %v235
      %254 = vmax.xlane.f32.xlu0 %v253
      %v255 = vpop.xlane.xlu0 %254
      %v256 = vmax.f32 %v236, %v237
      %257 = vmax.xlane.f32.xlu0 %v256
      %v258 = vpop.xlane.xlu0 %257
      %v259 = vmax.f32 %v238, %v239
      %260 = vmax.xlane.f32.xlu0 %v259
      %v261 = vpop.xlane.xlu0 %260
      %v262 = vmax.f32 %v240, %v241
      %263 = vmax.xlane.f32.xlu0 %v262
      %v264 = vpop.xlane.xlu0 %263
      %v265 = vmax.f32 %v242, %v243
      %266 = vmax.xlane.f32.xlu0 %v265
      %v267 = vpop.xlane.xlu0 %266
      %v268 = vld [vmem:[%s1] sm:$0xff]
      %v269 = vld [vmem:[%s1 + $0x8] sm:$0xff]
      %v270 = vld [vmem:[%s1 + $0x10] sm:$0xff]
      %v271 = vld [vmem:[%s1 + $0x18] sm:$0xff]
      %v272 = vld [vmem:[%s2] sm:$0xf]
      %v281 = vlaneseq
      %v282 = vand.u32 %v281, 127
      %v283 = vlaneseq
      %v284 = vshrl.u32 %v283, 7
      %v285 = vsub.s32 %v282, %v284
      %v286 = vrot.slane %v220, %v285
      %v287 = vadd.s32 %v282, 4294967288
      %v288 = vlaneseq
      %v289 = vshrl.u32 %v288, 7
      %v290 = vsub.s32 %v287, %v289
      %v291 = vrot.slane %v221, %v290
      %vm292 = vcmask 130112
      %v293 = vsel %vm292, %v291, %v286
      %v294 = vadd.s32 %v282, 4294967280
      %v295 = vlaneseq
      %v296 = vshrl.u32 %v295, 7
      %v297 = vsub.s32 %v294, %v296
      %v298 = vrot.slane %v222, %v297
      %vm299 = vcmask 195712
      %v300 = vsel %vm299, %v298, %v293
      %v301 = vadd.s32 %v282, 4294967272
      %v302 = vlaneseq
      %v303 = vshrl.u32 %v302, 7
      %v304 = vsub.s32 %v301, %v303
      %v305 = vrot.slane %v223, %v304
      %vm306 = vcmask 261312
      %v307 = vsel %vm306, %v305, %v300
      %v308 = vlaneseq
      %v309 = vshrl.u32 %v308, 7
      %v310 = vsub.s32 %v282, %v309
      %v311 = vrot.slane %v224, %v310
      %v312 = vlaneseq
      %v313 = vshrl.u32 %v312, 7
      %v314 = vsub.s32 %v287, %v313
      %v315 = vrot.slane %v225, %v314
      %v316 = vsel %vm292, %v315, %v311
      %v317 = vlaneseq
      %v318 = vshrl.u32 %v317, 7
      %v319 = vsub.s32 %v294, %v318
      %v320 = vrot.slane %v226, %v319
      %v321 = vsel %vm299, %v320, %v316
      %v322 = vlaneseq
      %v323 = vshrl.u32 %v322, 7
      %v324 = vsub.s32 %v301, %v323
      %v325 = vrot.slane %v227, %v324
      %v326 = vsel %vm306, %v325, %v321
      %vm327 = vcmask 1041409
      %v328 = vsel %vm327, %v326, %v307
      %vm329 = vcmask 261120
      %v330 = vsel %vm329, %v328, 0
      %332 = vmatprep.subr.mxu0 0.0
      %333 = vmatpush1.msra.mxu0 0.0
      %334 = vmatprep.subr.mxu0 0.0
      %335 = vmatpush1.msra.mxu0 0.0
      %336 = vmatprep.subr.mxu0 0.0
      %337 = vmatpush1.msra.mxu0 0.0
      %338 = vmatprep.subr.mxu0 0.0
      %339 = vmatpush1.msra.mxu0 0.0
      %340 = vmatprep.subr.mxu0 0.0
      %341 = vmatpush1.msra.mxu0 0.0
      %342 = vmatprep.subr.mxu0 0.0
      %343 = vmatpush1.msra.mxu0 0.0
      %344 = vmatprep.subr.mxu0 0.0
      %345 = vmatpush1.msra.mxu0 0.0
      %346 = vmatprep.subr.mxu0 0.0
      %347 = vmatpush1.msra.mxu0 0.0
      %348 = vmatprep.subr.mxu0 0.0
      %349 = vmatpush1.msra.mxu0 0.0
      %350 = vmatprep.subr.mxu0 0.0
      %351 = vmatpush1.msra.mxu0 0.0
      %352 = vmatprep.subr.mxu0 0.0
      %353 = vmatpush1.msra.mxu0 0.0
      %354 = vmatprep.subr.mxu0 0.0
      %355 = vmatpush1.msra.mxu0 0.0
      %356 = vmatprep.subr.mxu0 0.0
      %357 = vmatpush1.msra.mxu0 %v271
      %358 = vmatprep.subr.mxu0 0.0
      %359 = vmatpush1.msra.mxu0 %v270
      %360 = vmatprep.subr.mxu0 0.0
      %361 = vmatpush1.msra.mxu0 %v269
      %362 = vmatprep.subr.mxu0 0.0
      %363 = vmatpush1.msra.mxu0 %v268
      %364 = vmatprep.subr.mxu0 0.0
      %365 = vmatpush2.msra.mxu0 0.0
      %366 = vmatprep.subr.mxu0 0.0
      %367 = vmatpush2.msra.mxu0 0.0
      %368 = vmatprep.subr.mxu0 0.0
      %369 = vmatpush2.msra.mxu0 0.0
      %370 = vmatprep.subr.mxu0 0.0
      %371 = vmatpush2.msra.mxu0 0.0
      %372 = vmatprep.subr.mxu0 0.0
      %373 = vmatpush2.msra.mxu0 0.0
      %374 = vmatprep.subr.mxu0 0.0
      %375 = vmatpush2.msra.mxu0 0.0
      %376 = vmatprep.subr.mxu0 0.0
      %377 = vmatpush2.msra.mxu0 0.0
      %378 = vmatprep.subr.mxu0 0.0
      %379 = vmatpush2.msra.mxu0 0.0
      %380 = vmatprep.subr.mxu0 0.0
      %381 = vmatpush2.msra.mxu0 0.0
      %382 = vmatprep.subr.mxu0 0.0
      %383 = vmatpush2.msra.mxu0 0.0
      %384 = vmatprep.subr.mxu0 0.0
      %385 = vmatpush2.msra.mxu0 0.0
      %386 = vmatprep.subr.mxu0 0.0
      %387 = vmatpush2.msra.mxu0 0.0
      %388 = vmatprep.subr.mxu0 0.0
      %389 = vmatpush2.msra.mxu0 0.0
      %390 = vmatprep.subr.mxu0 0.0
      %391 = vmatpush2.msra.mxu0 0.0
      %392 = vmatprep.subr.mxu0 0.0
      %393 = vmatpush2.msra.mxu0 0.0
      %394 = vmatprep.subr.mxu0 0.0
      %395 = vmatpush2.msra.mxu0 0.0
      %396 = vmatprep.mubr.f32.mxu0 0.0
      %397 = vmatmul.mubr.f32.gmra.mxu0 %v330
      %v398 = vpop.f32.mrf.mxu0
      %v399 = vadd.f32 0.0, %v398
      %v400 = vpop.f32.mrf.mxu0
      %401 = vdwg.mxu0
      %v402 = vmax.f32 %v399, 0.0
      %v411 = vlaneseq
      %v412 = vshrl.u32 %v411, 7
      %v413 = vsub.s32 %v282, %v412
      %v414 = vrot.slane %v246, %v413
      %v415 = vlaneseq
      %v416 = vshrl.u32 %v415, 7
      %v417 = vsub.s32 %v287, %v416
      %v418 = vrot.slane %v249, %v417
      %v419 = vsel %vm292, %v418, %v414
      %v420 = vlaneseq
      %v421 = vshrl.u32 %v420, 7
      %v422 = vsub.s32 %v294, %v421
      %v423 = vrot.slane %v252, %v422
      %v424 = vsel %vm299, %v423, %v419
      %v425 = vlaneseq
      %v426 = vshrl.u32 %v425, 7
      %v427 = vsub.s32 %v301, %v426
      %v428 = vrot.slane %v255, %v427
      %v429 = vsel %vm306, %v428, %v424
      %v430 = vlaneseq
      %v431 = vshrl.u32 %v430, 7
      %v432 = vsub.s32 %v282, %v431
      %v433 = vrot.slane %v258, %v432
      %v434 = vlaneseq
      %v435 = vshrl.u32 %v434, 7
      %v436 = vsub.s32 %v287, %v435
      %v437 = vrot.slane %v261, %v436
      %v438 = vsel %vm292, %v437, %v433
      %v439 = vlaneseq
      %v440 = vshrl.u32 %v439, 7
      %v441 = vsub.s32 %v294, %v440
      %v442 = vrot.slane %v264, %v441
      %v443 = vsel %vm299, %v442, %v438
      %v444 = vlaneseq
      %v445 = vshrl.u32 %v444, 7
      %v446 = vsub.s32 %v301, %v445
      %v447 = vrot.slane %v267, %v446
      %v448 = vsel %vm306, %v447, %v443
      %v449 = vsel %vm327, %v448, %v429
      %v450 = vsel %vm329, %v449, 0
      %452 = vmatprep.subr.mxu0 0.0
      %453 = vmatpush1.msra.mxu0 0.0
      %454 = vmatprep.subr.mxu0 0.0
      %455 = vmatpush1.msra.mxu0 0.0
      %456 = vmatprep.subr.mxu0 0.0
      %457 = vmatpush1.msra.mxu0 0.0
      %458 = vmatprep.subr.mxu0 0.0
      %459 = vmatpush1.msra.mxu0 0.0
      %460 = vmatprep.subr.mxu0 0.0
      %461 = vmatpush1.msra.mxu0 0.0
      %462 = vmatprep.subr.mxu0 0.0
      %463 = vmatpush1.msra.mxu0 0.0
      %464 = vmatprep.subr.mxu0 0.0
      %465 = vmatpush1.msra.mxu0 0.0
      %466 = vmatprep.subr.mxu0 0.0
      %467 = vmatpush1.msra.mxu0 0.0
      %468 = vmatprep.subr.mxu0 0.0
      %469 = vmatpush1.msra.mxu0 0.0
      %470 = vmatprep.subr.mxu0 0.0
      %471 = vmatpush1.msra.mxu0 0.0
      %472 = vmatprep.subr.mxu0 0.0
      %473 = vmatpush1.msra.mxu0 0.0
      %474 = vmatprep.subr.mxu0 0.0
      %475 = vmatpush1.msra.mxu0 0.0
      %476 = vmatprep.subr.mxu0 0.0
      %477 = vmatpush1.msra.mxu0 %v271
      %478 = vmatprep.subr.mxu0 0.0
      %479 = vmatpush1.msra.mxu0 %v270
      %480 = vmatprep.subr.mxu0 0.0
      %481 = vmatpush1.msra.mxu0 %v269
      %482 = vmatprep.subr.mxu0 0.0
      %483 = vmatpush1.msra.mxu0 %v268
      %484 = vmatprep.subr.mxu0 0.0
      %485 = vmatpush2.msra.mxu0 0.0
      %486 = vmatprep.subr.mxu0 0.0
      %487 = vmatpush2.msra.mxu0 0.0
      %488 = vmatprep.subr.mxu0 0.0
      %489 = vmatpush2.msra.mxu0 0.0
      %490 = vmatprep.subr.mxu0 0.0
      %491 = vmatpush2.msra.mxu0 0.0
      %492 = vmatprep.subr.mxu0 0.0
      %493 = vmatpush2.msra.mxu0 0.0
      %494 = vmatprep.subr.mxu0 0.0
      %495 = vmatpush2.msra.mxu0 0.0
      %496 = vmatprep.subr.mxu0 0.0
      %497 = vmatpush2.msra.mxu0 0.0
      %498 = vmatprep.subr.mxu0 0.0
      %499 = vmatpush2.msra.mxu0 0.0
      %500 = vmatprep.subr.mxu0 0.0
      %501 = vmatpush2.msra.mxu0 0.0
      %502 = vmatprep.subr.mxu0 0.0
      %503 = vmatpush2.msra.mxu0 0.0
      %504 = vmatprep.subr.mxu0 0.0
      %505 = vmatpush2.msra.mxu0 0.0
      %506 = vmatprep.subr.mxu0 0.0
      %507 = vmatpush2.msra.mxu0 0.0
      %508 = vmatprep.subr.mxu0 0.0
      %509 = vmatpush2.msra.mxu0 0.0
      %510 = vmatprep.subr.mxu0 0.0
      %511 = vmatpush2.msra.mxu0 0.0
      %512 = vmatprep.subr.mxu0 0.0
      %513 = vmatpush2.msra.mxu0 0.0
      %514 = vmatprep.subr.mxu0 0.0
      %515 = vmatpush2.msra.mxu0 0.0
      %516 = vmatprep.mubr.f32.mxu0 0.0
      %517 = vmatmul.mubr.f32.gmra.mxu0 %v450
      %v518 = vpop.f32.mrf.mxu0
      %v519 = vadd.f32 0.0, %v518
      %v520 = vpop.f32.mrf.mxu0
      %521 = vdwg.mxu0
      %v522 = vmax.f32 %v519, 0.0
      %v523 = vadd.f32 %v402, %v522
      %vm524 = vcmask 31744
      %v526 = vsel %vm524, %v523, 0
      %vm528 = vcmask 1043456
      %v530 = vsel %vm528, %v272, 0
      %532 = vmatprep.subr.mxu0 0.0
      %533 = vmatpush1.msra.mxu0 0.0
      %534 = vmatprep.subr.mxu0 0.0
      %535 = vmatpush1.msra.mxu0 0.0
      %536 = vmatprep.subr.mxu0 0.0
      %537 = vmatpush1.msra.mxu0 0.0
      %538 = vmatprep.subr.mxu0 0.0
      %539 = vmatpush1.msra.mxu0 0.0
      %540 = vmatprep.subr.mxu0 0.0
      %541 = vmatpush1.msra.mxu0 0.0
      %542 = vmatprep.subr.mxu0 0.0
      %543 = vmatpush1.msra.mxu0 0.0
      %544 = vmatprep.subr.mxu0 0.0
      %545 = vmatpush1.msra.mxu0 0.0
      %546 = vmatprep.subr.mxu0 0.0
      %547 = vmatpush1.msra.mxu0 0.0
      %548 = vmatprep.subr.mxu0 0.0
      %549 = vmatpush1.msra.mxu0 0.0
      %550 = vmatprep.subr.mxu0 0.0
      %551 = vmatpush1.msra.mxu0 0.0
      %552 = vmatprep.subr.mxu0 0.0
      %553 = vmatpush1.msra.mxu0 0.0
      %554 = vmatprep.subr.mxu0 0.0
      %555 = vmatpush1.msra.mxu0 0.0
      %556 = vmatprep.subr.mxu0 0.0
      %557 = vmatpush1.msra.mxu0 0.0
      %558 = vmatprep.subr.mxu0 0.0
      %559 = vmatpush1.msra.mxu0 0.0
      %560 = vmatprep.subr.mxu0 0.0
      %561 = vmatpush1.msra.mxu0 0.0
      %562 = vmatprep.subr.mxu0 0.0
      %563 = vmatpush1.msra.mxu0 %v530
      %564 = vmatprep.subr.mxu0 0.0
      %565 = vmatpush2.msra.mxu0 0.0
      %566 = vmatprep.subr.mxu0 0.0
      %567 = vmatpush2.msra.mxu0 0.0
      %568 = vmatprep.subr.mxu0 0.0
      %569 = vmatpush2.msra.mxu0 0.0
      %570 = vmatprep.subr.mxu0 0.0
      %571 = vmatpush2.msra.mxu0 0.0
      %572 = vmatprep.subr.mxu0 0.0
      %573 = vmatpush2.msra.mxu0 0.0
      %574 = vmatprep.subr.mxu0 0.0
      %575 = vmatpush2.msra.mxu0 0.0
      %576 = vmatprep.subr.mxu0 0.0
      %577 = vmatpush2.msra.mxu0 0.0
      %578 = vmatprep.subr.mxu0 0.0
      %579 = vmatpush2.msra.mxu0 0.0
      %580 = vmatprep.subr.mxu0 0.0
      %581 = vmatpush2.msra.mxu0 0.0
      %582 = vmatprep.subr.mxu0 0.0
      %583 = vmatpush2.msra.mxu0 0.0
      %584 = vmatprep.subr.mxu0 0.0
      %585 = vmatpush2.msra.mxu0 0.0
      %586 = vmatprep.subr.mxu0 0.0
      %587 = vmatpush2.msra.mxu0 0.0
      %588 = vmatprep.subr.mxu0 0.0
      %589 = vmatpush2.msra.mxu0 0.0
      %590 = vmatprep.subr.mxu0 0.0
      %591 = vmatpush2.msra.mxu0 0.0
      %592 = vmatprep.subr.mxu0 0.0
      %593 = vmatpush2.msra.mxu0 0.0
      %594 = vmatprep.subr.mxu0 0.0
      %595 = vmatpush2.msra.mxu0 0.0
      %596 = vmatprep.mubr.f32.mxu0 0.0
      %597 = vmatmul.mubr.f32.gmra.mxu0 %v526
      %v598 = vpop.f32.mrf.mxu0
      %v599 = vadd.f32 0.0, %v598
      %v600 = vpop.f32.mrf.mxu0
      %601 = vdwg.mxu0
      %v602 = vxor.u32 %v599, 2147483648
      %v603 = vmul.f32 %v602, 1.442695
      %v604 = vpow.pop %v603
      %v605 = vadd.f32 %v604, 1.0
      %v606 = vrcp.pop %v605
      %v607 = vmul.f32 1.0, %v606
      %vm608 = vcmask 254976
      %609 = vst.msk [vmem:[#allocation7] sm:$0x3] %vm608, %v607
    $region25: #{tpu_custom_call.1} parent=1 // pred_fallthru
      _
    // Predicated region
    $region26: #{tpu_custom_call.1} parent=1 // pred_check
      _
    $region27: #{tpu_custom_call.1} parent=1 // pred_check_branch
      %611 = sbr.rel (0) target = $region29
    $region28: #{tpu_custom_call.1} parent=1 // pred_region
      %s613 = ssub.s32 32, 32
      %614 = vsyncadd [#allocation6], %s613
      %s616 = sshll.u32 [#allocation7], 4
      %s617 = int_to_ptr.vmem [resolvable:$true] %s616
      %619 = dma.vmem_to_hbm [thread:$0]  %s617, 32, %s3, [#allocation6]
    $region29: #{tpu_custom_call.1} parent=1 // pred_fallthru
      _
    // Predicated region
    $region30: #{tpu_custom_call.1} parent=1 // pred_check
      _
    $region31: #{tpu_custom_call.1} parent=1 // pred_check_branch
      %621 = sbr.rel (0) target = $region33
    $region32: #{tpu_custom_call.1} parent=1 // pred_region
      %622 = dma.done [#allocation6], 32
    $region33: #{tpu_custom_call.1} parent=1 // pred_fallthru
      _
    %623 = vsyncpa [#allocation5], 1
    %624 = vsyncpa [#allocation6], 1

</llo_original>
